<compile_context>
chip_gen: v5e
topology: v5e:2x2
jax: 0.10.0
libtpu: 0.0.40
codegen_flags: <defaults>
</compile_context>

<pallas_src>
import jax
import jax.numpy as jnp
from jax.experimental import pallas as pl
from jax.experimental.pallas import tpu as pltpu


def se_attention_kernel(x_ref, w1t_ref, w2t_ref, o_ref):
    # x_ref: (Bt, C, HW) block, NCHW-native (HW on lanes, C on sublanes).
    # AdaptiveAvgPool2d(1) over the trailing (1, C) dims == mean over channels
    # at each spatial position: a sublane (axis=1) reduction.
    pooled = jnp.mean(x_ref[...], axis=1)                       # (Bt, HW) f32

    # SE MLP, batched over the Bt images of this slab (default MXU precision).
    hid = jnp.dot(pooled, w1t_ref[...], preferred_element_type=jnp.float32)
    hid = jnp.maximum(hid, 0.0)                                 # (Bt, hidden)
    att = jnp.dot(hid, w2t_ref[...], preferred_element_type=jnp.float32)
    att = jax.nn.sigmoid(att)                                   # (Bt, HW)

    # Scale every channel at spatial position p by att[:, p].  Re-read the
    # slab from the VMEM ref (instead of keeping it live across the MLP) and
    # broadcast att across the channel (sublane) axis.  Lane-dense store.
    o_ref[...] = (x_ref[...] * att[:, None, :]).astype(o_ref.dtype)


def _vmem_budget():
    """(physical VMEM bytes, explicit compiler limit) for this TPU generation.

    5/8 of physical: ~80 MiB on v5e/v6e (128 MiB physical), ~40 MiB on v7x
    (64 MiB physical).  Falls back to the smallest (v7x-sized) VMEM if the
    query is unavailable, which is safe on every generation."""
    try:
        phys = int(pltpu.get_tpu_info().vmem_capacity_bytes)
    except Exception:
        phys = 64 << 20
    return phys, (phys * 5) // 8


def _pick_batch_tile(b, per_image_bytes, slab_budget_bytes, min_steps=4):
    """Largest Bt whose (Bt, C, HW) slab fits the budget while keeping
    >= min(min_steps, b) grid steps (pipeline steady state, >= 2 steps per
    v7x core).  No divisibility requirement: the grid uses cdiv(b, Bt)."""
    target_steps = min(min_steps, b)
    max_bt = min(b, max(1, slab_budget_bytes // max(1, per_image_bytes)))
    for bt in range(max_bt, 0, -1):
        if pl.cdiv(b, bt) >= target_steps:
            return bt
    return 1


def se_attention(x_nchw, w1, w2):
    """x_nchw: (b, c, h, w).  w1: (c//r, c), w2: (c, c//r)  (PyTorch Linear layout)."""
    b, c, h, w = x_nchw.shape
    hw = h * w
    # nn.Linear(channels, ...) is applied to a (b, h*w) tensor, so the module's
    # forward is only defined when h*w == channels.
    assert hw == c, "SEAttention requires h*w == channels"
    hidden = w1.shape[0]
    itemsize = x_nchw.dtype.itemsize

    x_flat = x_nchw.reshape(b, c, hw)      # free view -- no transpose
    w1_t = w1.T                            # (c, hidden)   tiny, one-time
    w2_t = w2.T                            # (hidden, c)

    # Slab sizing: the in+out double-buffered pipeline needs ~4x slab plus the
    # (double-buffered) weight buffers; keep that under the explicit limit.
    phys_vmem, vmem_limit = _vmem_budget()
    weight_buf_bytes = 2 * 2 * c * hidden * itemsize      # 2 weights x 2 buffers
    per_image = c * hw * itemsize
    slab_budget = max(per_image, (vmem_limit - weight_buf_bytes) // 5)
    bt = _pick_batch_tile(b, per_image, slab_budget)
    steps = pl.cdiv(b, bt)
    vmem_limit = int(min(phys_vmem,
                         max(vmem_limit,
                             4 * bt * per_image + weight_buf_bytes + (1 << 20))))

    out_flat = pl.pallas_call(
        se_attention_kernel,
        out_shape=jax.ShapeDtypeStruct((b, c, hw), x_flat.dtype),
        grid_spec=pltpu.PrefetchScalarGridSpec(
            num_scalar_prefetch=0,
            grid=(steps,),
            in_specs=[
                pl.BlockSpec((bt, c, hw), lambda i: (i, 0, 0)),
                pl.BlockSpec((c, hidden), lambda i: (0, 0)),
                pl.BlockSpec((hidden, c), lambda i: (0, 0)),
            ],
            out_specs=pl.BlockSpec((bt, c, hw), lambda i: (i, 0, 0)),
        ),
        compiler_params=pltpu.CompilerParams(
            # "parallel" lets the runtime shard the batch axis across
            # TensorCores on multi-core chips (v7x); with >= 4 steps each core
            # gets >= 2.  Single-TC v5e/v6e: no-op.
            dimension_semantics=("parallel",),
            vmem_limit_bytes=vmem_limit,
        ),
    )(x_flat, w1_t, w2_t)

    return out_flat.reshape(b, c, h, w)    # free view back to NCHW


def se_attention_ref(x, w1, w2):
    """Pure-JAX reference mirroring the PyTorch forward exactly."""
    b, c, h, w = x.shape
    hw = h * w
    m = jnp.transpose(x.reshape(b, c, hw), (0, 2, 1))                     # (b, hw, c)
    n = jnp.mean(m, axis=2)                                               # (b, hw)
    n = jax.nn.relu(jnp.dot(n, w1.T, precision=jax.lax.Precision.HIGHEST))
    n = jax.nn.sigmoid(jnp.dot(n, w2.T, precision=jax.lax.Precision.HIGHEST))
    out = m * n[:, :, None]                                               # (b, hw, c)
    return jnp.transpose(out.reshape(b, h, w, c), (0, 3, 1, 2))


if __name__ == "__main__":
    # channels must equal h*w for this module's forward to be well-defined.
    # Small but lane-dense demo: hw = 8*16 = 128 (lane axis), c = 128.
    batch, channels, height, width = 4, 128, 8, 16
    reduction = 4
    hidden = channels // reduction

    key = jax.random.PRNGKey(0)
    kx, k1, k2 = jax.random.split(key, 3)
    x = jax.random.normal(kx, (batch, channels, height, width), dtype=jnp.float32)
    w1 = 0.1 * jax.random.normal(k1, (hidden, channels), dtype=jnp.float32)   # Linear(c, c//r).weight
    w2 = 0.1 * jax.random.normal(k2, (channels, hidden), dtype=jnp.float32)   # Linear(c//r, c).weight

    se_fn = jax.jit(se_attention)
    out = jax.block_until_ready(se_fn(x, w1, w2))

    ref = se_attention_ref(x, w1, w2)
    assert out.shape == (batch, channels, height, width)
    # Kernel GEMMs run at default MXU precision (bf16 passes, f32 accumulate);
    # tolerance sized for that vs the HIGHEST-precision reference.
    assert jnp.allclose(out, ref, atol=2e-3, rtol=2e-3), "mismatch vs reference"

    print("KERNEL_OK")
</pallas_src>

<mosaic_0001>
module attributes {stable_mosaic.version = 11 : i64} {
  func.func @se_attention_kernel(%arg0: i32, %arg1: memref<1x128x128xf32, #tpu.memory_space<vmem>>, %arg2: memref<128x32xf32, #tpu.memory_space<vmem>>, %arg3: memref<32x128xf32, #tpu.memory_space<vmem>>, %arg4: memref<1x128x128xf32, #tpu.memory_space<vmem>>) attributes {dimension_semantics = [#tpu.dimension_semantics<parallel>], iteration_bounds = array<i64: 4>, scalar_prefetch = 0 : i64, scratch_operands = 0 : i64, tpu.core_type = #tpu.core_type<tc>, window_params = [{transform_indices = @transform_0, window_bounds = array<i64: 1, 128, 128>}, {pipeline_mode = #tpu.pipeline_mode<synchronous>, transform_indices = @transform_1, window_bounds = array<i64: 128, 32>}, {pipeline_mode = #tpu.pipeline_mode<synchronous>, transform_indices = @transform_2, window_bounds = array<i64: 32, 128>}, {transform_indices = @transform_3, window_bounds = array<i64: 1, 128, 128>}]} {
    %c0 = arith.constant 0 : index
    %c0_0 = arith.constant 0 : index
    %c0_1 = arith.constant 0 : index
    %0 = vector.load %arg1[%c0, %c0_0, %c0_1] : memref<1x128x128xf32, #tpu.memory_space<vmem>>, vector<1x128x128xf32>
    %cst = arith.constant dense<0.000000e+00> : vector<1x128xf32>
    %1 = vector.multi_reduction <add>, %0, %cst [1] : vector<1x128x128xf32> to vector<1x128xf32>
    %cst_2 = arith.constant 1.280000e+02 : f32
    %2 = vector.broadcast %cst_2 : f32 to vector<1x128xf32>
    %3 = arith.divf %1, %2 : vector<1x128xf32>
    %c0_3 = arith.constant 0 : index
    %c0_4 = arith.constant 0 : index
    %4 = vector.load %arg2[%c0_3, %c0_4] : memref<128x32xf32, #tpu.memory_space<vmem>>, vector<128x32xf32>
    %cst_5 = arith.constant dense<0.000000e+00> : vector<1x32xf32>
    %5 = tpu.matmul %3, %4, %cst_5 {dimension_numbers = #tpu.dot_dimension_numbers<[1], [0], [0], [1], [0, 0, 1, 1], [], []>} : vector<1x128xf32>, vector<128x32xf32>, vector<1x32xf32> -> vector<1x32xf32>
    %cst_6 = arith.constant 0.000000e+00 : f32
    %6 = vector.broadcast %cst_6 : f32 to vector<1x32xf32>
    %7 = arith.maximumf %5, %6 : vector<1x32xf32>
    %c0_7 = arith.constant 0 : index
    %c0_8 = arith.constant 0 : index
    %8 = vector.load %arg3[%c0_7, %c0_8] : memref<32x128xf32, #tpu.memory_space<vmem>>, vector<32x128xf32>
    %cst_9 = arith.constant dense<0.000000e+00> : vector<1x128xf32>
    %9 = tpu.matmul %7, %8, %cst_9 {dimension_numbers = #tpu.dot_dimension_numbers<[1], [0], [0], [1], [0, 0, 1, 1], [], []>} : vector<1x32xf32>, vector<32x128xf32>, vector<1x128xf32> -> vector<1x128xf32>
    %10 = arith.negf %9 : vector<1x128xf32>
    %11 = math.exp %10 : vector<1x128xf32>
    %cst_10 = arith.constant 1.000000e+00 : f32
    %12 = vector.broadcast %cst_10 : f32 to vector<1x128xf32>
    %13 = arith.addf %12, %11 : vector<1x128xf32>
    %14 = arith.divf %12, %13 : vector<1x128xf32>
    %c0_11 = arith.constant 0 : index
    %c0_12 = arith.constant 0 : index
    %c0_13 = arith.constant 0 : index
    %15 = vector.load %arg1[%c0_11, %c0_12, %c0_13] : memref<1x128x128xf32, #tpu.memory_space<vmem>>, vector<1x128x128xf32>
    %16 = vector.shape_cast %14 : vector<1x128xf32> to vector<1x1x128xf32>
    %17 = vector.broadcast %16 : vector<1x1x128xf32> to vector<1x128x128xf32>
    %18 = arith.mulf %15, %17 : vector<1x128x128xf32>
    %c0_14 = arith.constant 0 : index
    %c0_15 = arith.constant 0 : index
    %c0_16 = arith.constant 0 : index
    %19 = vector.load %arg4[%c0_14, %c0_15, %c0_16] : memref<1x128x128xf32, #tpu.memory_space<vmem>>, vector<1x128x128xf32>
    tpu.vector_store %arg4[%c0_14, %c0_15, %c0_16], %18 {strides = array<i32>} : memref<1x128x128xf32, #tpu.memory_space<vmem>>, vector<1x128x128xf32>,
    return
  }
  func.func @transform_0(%arg0: i32) -> (i32, i32, i32) {
    %c0_i32 = arith.constant 0 : i32
    %c0_i32_0 = arith.constant 0 : i32
    %c0_i32_1 = arith.constant 0 : i32
    return %arg0, %c0_i32, %c0_i32_0 : i32, i32, i32
  }
  func.func @transform_1(%arg0: i32) -> (i32, i32) {
    %c0_i32 = arith.constant 0 : i32
    %c0_i32_0 = arith.constant 0 : i32
    %c0_i32_1 = arith.constant 0 : i32
    return %c0_i32, %c0_i32_0 : i32, i32
  }
  func.func @transform_2(%arg0: i32) -> (i32, i32) {
    %c0_i32 = arith.constant 0 : i32
    %c0_i32_0 = arith.constant 0 : i32
    %c0_i32_1 = arith.constant 0 : i32
    return %c0_i32, %c0_i32_0 : i32, i32
  }
  func.func @transform_3(%arg0: i32) -> (i32, i32, i32) {
    %c0_i32 = arith.constant 0 : i32
    %c0_i32_0 = arith.constant 0 : i32
    %c0_i32_1 = arith.constant 0 : i32
    return %arg0, %c0_i32, %c0_i32_0 : i32, i32, i32
  }
}

</mosaic_0001>

<llo_original>
// kernel: se_attention.1
$region0: #{se_attention.1}
  #allocation0 [shape = 'u32[]', space=smem, size = 0x4, offset = 0x4, fixed_abs, tag = 'smem constant byte address 0x4 - core index']
  #allocation1 [shape = 'u32[72,128]{1,0:T(1,128)}', space=vmem, size = 0x9000, scoped, tag = 'internal scratch']
  %s0 = inlined_call_operand.vmem [shape: f32[4,128,128], index: 0, kind: input, shape index: {}]
  %s1 = inlined_call_operand.vmem [shape: f32[128,32], index: 1, kind: input, shape index: {}]
  %s2 = inlined_call_operand.vmem [shape: f32[32,128], index: 2, kind: input, shape index: {}]
  %s3 = inlined_call_operand.vmem [shape: f32[4,128,128], index: 3, kind: output, shape index: {}]
  %s4 = sld [smem:[#allocation0]]
  $region45: #{se_attention.1} parent=0
    _
  %s6 = ssub.s32 1, %s4
  %s7 = scalar_select 0, %s6, %s4
  loop: start=0, step=1, limit=6
  $region2: #{se_attention.1} parent=0 // loop_pre_header
    _
  $region3: #{se_attention.1} parent=0 // loop_header
    %s9 = sphi 0, %s13
    %p10 = scmp.ge.s32.totalorder %s9, 6
    %s19 = sphi 0, %s21
    %s22 = sphi 0, %s19
    %s23 = sphi 0, %s22
    %s39 = sphi 0, %s23
    %s43 = sphi 0, %s43
    %s45 = sphi 0, %s43
    %s46 = sphi 0, %s45
    %s60 = sphi 0, %s46
    %s64 = sphi 0, %s64
    %s66 = sphi 0, %s64
    %s67 = sphi 0, %s66
    %s81 = sphi 0, %s67
    %s87 = sphi 0, %s89
    %s90 = sphi 0, %s87
    %s91 = sphi 0, %s90
    %s107 = sphi 0, %s91
  $region4: #{se_attention.1} parent=0 // loop_header_branch
    %12 = sbr.rel (%p10) target = $region8
  $region5: #{se_attention.1} parent=0 // loop_body
    %s14 = ssub.s32 %s9, 1
    %s15 = ssub.s32 %s9, 2
    %s16 = sadd.s32 %s9, 1
    %s17 = ssub.s32 %s9, %s16
    %p18 = scmp.eq.s32.totalorder %s17, 0
    %s20 = sadd.s32 %s19, 1
    %s21 = scalar_select %p18, %s19, %s20
    %p24 = pneg %p18
    %p25 = scmp.eq.s32.totalorder %s9, 3
    %p26 = por %p24, %p25
    %p27 = scmp.ne.s32.totalorder %s19, %s22
    %p28 = scmp.eq.s32.totalorder %s9, 0
    %p29 = por %p27, %p28
    %p30 = scmp.ne.s32.totalorder %s19, %s22
    %p31 = scmp.eq.s32.totalorder %s14, 3
    %p32 = por %p30, %p31
    %p33 = scmp.ne.s32.totalorder %s22, %s23
    %p34 = scmp.eq.s32.totalorder %s14, 0
    %p35 = por %p33, %p34
    %p36 = scmp.ne.s32.totalorder %s22, %s23
    %p37 = scmp.eq.s32.totalorder %s15, 3
    %p38 = por %p36, %p37
    %p40 = scmp.ne.s32.totalorder %s23, %s39
    %p41 = scmp.eq.s32.totalorder %s15, 0
    %p42 = por %p40, %p41
    %s44 = sadd.s32 %s43, 1
    %p47 = scmp.eq.s32.totalorder %s9, 3
    %p48 = scmp.ne.s32.totalorder %s43, %s45
    %p49 = scmp.eq.s32.totalorder %s9, 0
    %p50 = por %p48, %p49
    %p51 = scmp.ne.s32.totalorder %s43, %s45
    %p52 = scmp.eq.s32.totalorder %s14, 3
    %p53 = por %p51, %p52
    %p54 = scmp.ne.s32.totalorder %s45, %s46
    %p55 = scmp.eq.s32.totalorder %s14, 0
    %p56 = por %p54, %p55
    %p57 = scmp.ne.s32.totalorder %s45, %s46
    %p58 = scmp.eq.s32.totalorder %s15, 3
    %p59 = por %p57, %p58
    %p61 = scmp.ne.s32.totalorder %s46, %s60
    %p62 = scmp.eq.s32.totalorder %s15, 0
    %p63 = por %p61, %p62
    %s65 = sadd.s32 %s64, 1
    %p68 = scmp.eq.s32.totalorder %s9, 3
    %p69 = scmp.ne.s32.totalorder %s64, %s66
    %p70 = scmp.eq.s32.totalorder %s9, 0
    %p71 = por %p69, %p70
    %p72 = scmp.ne.s32.totalorder %s64, %s66
    %p73 = scmp.eq.s32.totalorder %s14, 3
    %p74 = por %p72, %p73
    %p75 = scmp.ne.s32.totalorder %s66, %s67
    %p76 = scmp.eq.s32.totalorder %s14, 0
    %p77 = por %p75, %p76
    %p78 = scmp.ne.s32.totalorder %s66, %s67
    %p79 = scmp.eq.s32.totalorder %s15, 3
    %p80 = por %p78, %p79
    %p82 = scmp.ne.s32.totalorder %s67, %s81
    %p83 = scmp.eq.s32.totalorder %s15, 0
    %p84 = por %p82, %p83
    %s85 = ssub.s32 %s9, %s16
    %p86 = scmp.eq.s32.totalorder %s85, 0
    %s88 = sadd.s32 %s87, 1
    %s89 = scalar_select %p86, %s87, %s88
    %p92 = pneg %p86
    %p93 = scmp.eq.s32.totalorder %s9, 3
    %p94 = por %p92, %p93
    %p95 = scmp.ne.s32.totalorder %s87, %s90
    %p96 = scmp.eq.s32.totalorder %s9, 0
    %p97 = por %p95, %p96
    %p98 = scmp.ne.s32.totalorder %s87, %s90
    %p99 = scmp.eq.s32.totalorder %s14, 3
    %p100 = por %p98, %p99
    %p101 = scmp.ne.s32.totalorder %s90, %s91
    %p102 = scmp.eq.s32.totalorder %s14, 0
    %p103 = por %p101, %p102
    %p104 = scmp.ne.s32.totalorder %s90, %s91
    %p105 = scmp.eq.s32.totalorder %s15, 3
    %p106 = por %p104, %p105
    %p108 = scmp.ne.s32.totalorder %s91, %s107
    %p109 = scmp.eq.s32.totalorder %s15, 0
    %p110 = por %p108, %p109
    %p111 = scmp.le.s32.totalorder 1, %s9
    %p112 = scmp.lt.s32.totalorder %s9, 5
    %p113 = pnand %p111, %p112
    %p114 = pneg %p113
    // Predicated region
    $region9: #{se_attention.1} parent=5 // pred_check
      _
    $region10: #{se_attention.1} parent=5 // pred_check_branch
      %116 = sbr.rel (%p113) target = $region12
    $region11: #{se_attention.1} parent=5 // pred_region
      %s117 = ssub.s32 %s9, 1
      // Predicated region
      $region13: #{se_attention.1} parent=11 // pred_check
        %p118 = pneg %p56
      $region14: #{se_attention.1} parent=11 // pred_check_branch
        %120 = sbr.rel (%p118) target = $region16
      $region15: #{se_attention.1} parent=11 // pred_region
        _
      $region16: #{se_attention.1} parent=11 // pred_fallthru
        _
      // Predicated region
      $region17: #{se_attention.1} parent=11 // pred_check
        %p121 = pneg %p77
      $region18: #{se_attention.1} parent=11 // pred_check_branch
        %123 = sbr.rel (%p121) target = $region20
      $region19: #{se_attention.1} parent=11 // pred_region
        _
      $region20: #{se_attention.1} parent=11 // pred_fallthru
        _
    $region12: #{se_attention.1} parent=5 // pred_fallthru
      _
    %p124 = scmp.lt.s32.totalorder %s9, 4
    // Predicated region
    $region21: #{se_attention.1} parent=5 // pred_check
      %p125 = pneg %p124
    $region22: #{se_attention.1} parent=5 // pred_check_branch
      %127 = sbr.rel (%p125) target = $region24
    $region23: #{se_attention.1} parent=5 // pred_region
      // Predicated region
      $region25: #{se_attention.1} parent=23 // pred_check
        %p128 = pneg %p29
      $region26: #{se_attention.1} parent=23 // pred_check_branch
        %130 = sbr.rel (%p128) target = $region28
      $region27: #{se_attention.1} parent=23 // pred_region
        %p131 = scmp.lt.s32.totalorder %s9, 3
        %s132 = scalar_select %p131, %s9, 3
        %s133 = smul.addr %s132, 16
        %s134 = smul.addr %s133, 8
        %s135 = scalar_lea.vmem %s0, %s134
      $region28: #{se_attention.1} parent=23 // pred_fallthru
        _
    $region24: #{se_attention.1} parent=5 // pred_fallthru
      _
    %p136 = scmp.le.s32.totalorder 1, %s9
    %p137 = scmp.lt.s32.totalorder %s9, 5
    %p138 = pnand %p136, %p137
    %p139 = pneg %p138
    // Predicated region
    $region29: #{se_attention.1} parent=5 // pred_check
      _
    $region30: #{se_attention.1} parent=5 // pred_check_branch
      %141 = sbr.rel (%p138) target = $region32
    $region31: #{se_attention.1} parent=5 // pred_region
      %s142 = ssub.s32 %s9, 1
      %p143 = scmp.lt.s32.totalorder %s14, 3
      %s144 = scalar_select %p143, %s14, 3
      %s145 = smul.addr %s144, 16
      %s146 = smul.addr %s145, 8
      %s147 = scalar_lea.vmem %s0, %s146
      %p148 = pneg %p35
      %p149 = pneg %p32
      %p150 = pneg %p56
      %p151 = pneg %p53
      %p152 = pneg %p77
      %p153 = pneg %p74
      %p154 = pneg %p103
      %p155 = pneg %p100
      %p156 = scmp.lt.s32.totalorder %s14, 3
      %s157 = scalar_select %p156, %s14, 3
      %s158 = smul.addr %s157, 16
      %s159 = smul.addr %s158, 8
      %s160 = scalar_lea.vmem %s3, %s159
      %p161 = scmp.lt.s32.totalorder %s14, 3
      %s162 = scalar_select %p161, %s14, 3
      %s163 = smul.addr %s162, 16
      %s164 = smul.addr %s163, 8
      %s165 = scalar_lea.vmem %s0, %s164
      %p166 = scmp.lt.s32.totalorder %s14, 3
      %s167 = scalar_select %p166, %s14, 3
      %s168 = smul.addr %s167, 16
      %s169 = smul.addr %s168, 8
      %s170 = scalar_lea.vmem %s3, %s169
      %v171 = vld [vmem:[%s165] sm:$0xff]
      %v172 = vld [vmem:[%s165 + $0x8] sm:$0xff]
      %v173 = vld [vmem:[%s165 + $0x10] sm:$0xff]
      %v174 = vld [vmem:[%s165 + $0x18] sm:$0xff]
      %v175 = vld [vmem:[%s165 + $0x20] sm:$0xff]
      %v176 = vld [vmem:[%s165 + $0x28] sm:$0xff]
      %v177 = vld [vmem:[%s165 + $0x30] sm:$0xff]
      %v178 = vld [vmem:[%s165 + $0x38] sm:$0xff]
      %v179 = vld [vmem:[%s165 + $0x40] sm:$0xff]
      %v180 = vld [vmem:[%s165 + $0x48] sm:$0xff]
      %v181 = vld [vmem:[%s165 + $0x50] sm:$0xff]
      %v182 = vld [vmem:[%s165 + $0x58] sm:$0xff]
      %v183 = vld [vmem:[%s165 + $0x60] sm:$0xff]
      %v184 = vld [vmem:[%s165 + $0x68] sm:$0xff]
      %v185 = vld [vmem:[%s165 + $0x70] sm:$0xff]
      %v186 = vld [vmem:[%s165 + $0x78] sm:$0xff]
      %v187 = vadd.f32 %v171, %v172
      %v188 = vadd.f32 %v187, %v173
      %v189 = vadd.f32 %v188, %v174
      %v190 = vadd.f32 %v189, %v175
      %v191 = vadd.f32 %v190, %v176
      %v192 = vadd.f32 %v191, %v177
      %v193 = vadd.f32 %v192, %v178
      %v194 = vadd.f32 %v193, %v179
      %v195 = vadd.f32 %v194, %v180
      %v196 = vadd.f32 %v195, %v181
      %v197 = vadd.f32 %v196, %v182
      %v198 = vadd.f32 %v197, %v183
      %v199 = vadd.f32 %v198, %v184
      %v200 = vadd.f32 %v199, %v185
      %v201 = vadd.f32 %v200, %v186
      %v202 = vrot.slane %v201, 4
      %v203 = vadd.f32 %v201, %v202
      %v204 = vrot.slane %v203, 2
      %v205 = vadd.f32 %v203, %v204
      %v206 = vrot.slane %v205, 1
      %v207 = vadd.f32 %v205, %v206
      %v208 = vrcp.pop 128.0
      %v209 = vmul.f32 128.0, %v208
      %v210 = vsub.f32 1.0, %v209
      %v211 = vmul.f32 %v208, %v210
      %v212 = vadd.f32 %v208, %v211
      %vm213 = vweird.f32 %v208
      %v214 = vsel %vm213, %v208, %v212
      %v215 = vmul.f32 %v207, %v214
      %v216 = vld [vmem:[%s1] sm:$0xff]
      %v217 = vld [vmem:[%s1 + $0x8] sm:$0xff]
      %v218 = vld [vmem:[%s1 + $0x10] sm:$0xff]
      %v219 = vld [vmem:[%s1 + $0x18] sm:$0xff]
      %v220 = vld [vmem:[%s1 + $0x20] sm:$0xff]
      %v221 = vld [vmem:[%s1 + $0x28] sm:$0xff]
      %v222 = vld [vmem:[%s1 + $0x30] sm:$0xff]
      %v223 = vld [vmem:[%s1 + $0x38] sm:$0xff]
      %v224 = vld [vmem:[%s1 + $0x40] sm:$0xff]
      %v225 = vld [vmem:[%s1 + $0x48] sm:$0xff]
      %v226 = vld [vmem:[%s1 + $0x50] sm:$0xff]
      %v227 = vld [vmem:[%s1 + $0x58] sm:$0xff]
      %v228 = vld [vmem:[%s1 + $0x60] sm:$0xff]
      %v229 = vld [vmem:[%s1 + $0x68] sm:$0xff]
      %v230 = vld [vmem:[%s1 + $0x70] sm:$0xff]
      %v231 = vld [vmem:[%s1 + $0x78] sm:$0xff]
      %232 = vmatpush.msra.mxu0 %v231
      %233 = vmatpush.msra.mxu0 %v230
      %234 = vmatpush.msra.mxu0 %v229
      %235 = vmatpush.msra.mxu0 %v228
      %236 = vmatpush.msra.mxu0 %v227
      %237 = vmatpush.msra.mxu0 %v226
      %238 = vmatpush.msra.mxu0 %v225
      %239 = vmatpush.msra.mxu0 %v224
      %240 = vmatpush.msra.mxu0 %v223
      %241 = vmatpush.msra.mxu0 %v222
      %242 = vmatpush.msra.mxu0 %v221
      %243 = vmatpush.msra.mxu0 %v220
      %244 = vmatpush.msra.mxu0 %v219
      %245 = vmatpush.msra.mxu0 %v218
      %246 = vmatpush.msra.mxu0 %v217
      %247 = vmatpush.msra.mxu0 %v216
      %248 = vmatmul.f32.gmra.mxu0 %v215
      %v249 = vpop.f32.mrf.mxu0
      %v250 = vadd.f32 0.0, %v249
      %251 = vdwg.mxu0
      %v252 = vmax.f32 %v250, 0.0
      %v253 = vld [vmem:[%s2] sm:$0xff]
      %v254 = vld [vmem:[%s2 + $0x8] sm:$0xff]
      %v255 = vld [vmem:[%s2 + $0x10] sm:$0xff]
      %v256 = vld [vmem:[%s2 + $0x18] sm:$0xff]
      %vm257 = vcmask 261120
      %v259 = vsel %vm257, %v252, 0
      %261 = vmatpush.msra.mxu0 0.0
      %262 = vmatpush.msra.mxu0 0.0
      %263 = vmatpush.msra.mxu0 0.0
      %264 = vmatpush.msra.mxu0 0.0
      %265 = vmatpush.msra.mxu0 0.0
      %266 = vmatpush.msra.mxu0 0.0
      %267 = vmatpush.msra.mxu0 0.0
      %268 = vmatpush.msra.mxu0 0.0
      %269 = vmatpush.msra.mxu0 0.0
      %270 = vmatpush.msra.mxu0 0.0
      %271 = vmatpush.msra.mxu0 0.0
      %272 = vmatpush.msra.mxu0 0.0
      %273 = vmatpush.msra.mxu0 %v256
      %274 = vmatpush.msra.mxu0 %v255
      %275 = vmatpush.msra.mxu0 %v254
      %276 = vmatpush.msra.mxu0 %v253
      %277 = vmatmul.f32.gmra.mxu0 %v259
      %v278 = vpop.f32.mrf.mxu0
      %v279 = vadd.f32 0.0, %v278
      %280 = vdwg.mxu0
      %v281 = vxor.u32 %v279, 2147483648
      %v282 = vmul.f32 %v281, 1.442695
      %v283 = vpow.pop %v282
      %v284 = vadd.f32 %v283, 1.0
      %v285 = vrcp.pop %v284
      %v286 = vmul.f32 %v284, %v285
      %v287 = vsub.f32 1.0, %v286
      %v288 = vmul.f32 %v285, %v287
      %v289 = vadd.f32 %v285, %v288
      %vm290 = vweird.f32 %v284
      %vm291 = vweird.f32 %v285
      %vm292 = vmor %vm290, %vm291
      %v293 = vsel %vm292, %v285, %v289
      %v294 = vand.u32 2147483647, %v284
      %vm295 = vcmp.eq.f32.partialorder %v294, 8.507059e+37
      %v296 = vand.u32 %v284, 2147483648
      %v297 = vor.u32 1.1754944e-38, %v296
      %v298 = vsel %vm295, %v297, %v293
      %v299 = vmul.f32 1.0, %v298
      %v300 = vperm.slane %v299, 0
      %v301 = vmul.f32 %v171, %v300
      %v302 = vmul.f32 %v172, %v300
      %v303 = vmul.f32 %v173, %v300
      %v304 = vmul.f32 %v174, %v300
      %v305 = vmul.f32 %v175, %v300
      %v306 = vmul.f32 %v176, %v300
      %v307 = vmul.f32 %v177, %v300
      %v308 = vmul.f32 %v178, %v300
      %v309 = vmul.f32 %v179, %v300
      %v310 = vmul.f32 %v180, %v300
      %v311 = vmul.f32 %v181, %v300
      %v312 = vmul.f32 %v182, %v300
      %v313 = vmul.f32 %v183, %v300
      %v314 = vmul.f32 %v184, %v300
      %v315 = vmul.f32 %v185, %v300
      %v316 = vmul.f32 %v186, %v300
      %317 = vst [vmem:[%s170] sm:$0xff] %v301
      %318 = vst [vmem:[%s170 + $0x8] sm:$0xff] %v302
      %319 = vst [vmem:[%s170 + $0x10] sm:$0xff] %v303
      %320 = vst [vmem:[%s170 + $0x18] sm:$0xff] %v304
      %321 = vst [vmem:[%s170 + $0x20] sm:$0xff] %v305
      %322 = vst [vmem:[%s170 + $0x28] sm:$0xff] %v306
      %323 = vst [vmem:[%s170 + $0x30] sm:$0xff] %v307
      %324 = vst [vmem:[%s170 + $0x38] sm:$0xff] %v308
      %325 = vst [vmem:[%s170 + $0x40] sm:$0xff] %v309
      %326 = vst [vmem:[%s170 + $0x48] sm:$0xff] %v310
      %327 = vst [vmem:[%s170 + $0x50] sm:$0xff] %v311
      %328 = vst [vmem:[%s170 + $0x58] sm:$0xff] %v312
      %329 = vst [vmem:[%s170 + $0x60] sm:$0xff] %v313
      %330 = vst [vmem:[%s170 + $0x68] sm:$0xff] %v314
      %331 = vst [vmem:[%s170 + $0x70] sm:$0xff] %v315
      %332 = vst [vmem:[%s170 + $0x78] sm:$0xff] %v316
      %p333 = scmp.lt.s32.totalorder %s14, 3
      %s334 = scalar_select %p333, %s14, 3
      %s335 = smul.addr %s334, 16
      %s336 = smul.addr %s335, 8
      %s337 = scalar_lea.vmem %s3, %s336
      // Predicated region
      $region33: #{se_attention.1} parent=31 // pred_check
        %p338 = pneg %p100
      $region34: #{se_attention.1} parent=31 // pred_check_branch
        %340 = sbr.rel (%p338) target = $region36
      $region35: #{se_attention.1} parent=31 // pred_region
        _
      $region36: #{se_attention.1} parent=31 // pred_fallthru
        _
    $region32: #{se_attention.1} parent=5 // pred_fallthru
      _
    %p341 = scmp.le.s32.totalorder 2, %s9
    // Predicated region
    $region37: #{se_attention.1} parent=5 // pred_check
      %p342 = pneg %p341
    $region38: #{se_attention.1} parent=5 // pred_check_branch
      %344 = sbr.rel (%p342) target = $region40
    $region39: #{se_attention.1} parent=5 // pred_region
      %s345 = ssub.s32 %s9, 2
      // Predicated region
      $region41: #{se_attention.1} parent=39 // pred_check
        %p346 = pneg %p106
      $region42: #{se_attention.1} parent=39 // pred_check_branch
        %348 = sbr.rel (%p346) target = $region44
      $region43: #{se_attention.1} parent=39 // pred_region
        %p349 = scmp.lt.s32.totalorder %s15, 3
        %s350 = scalar_select %p349, %s15, 3
        %s351 = smul.addr %s350, 16
        %s352 = smul.addr %s351, 8
        %s353 = scalar_lea.vmem %s3, %s352
      $region44: #{se_attention.1} parent=39 // pred_fallthru
        _
    $region40: #{se_attention.1} parent=5 // pred_fallthru
      _
  $region6: #{se_attention.1} parent=0 // loop_footer
    %s13 = sadd.s32 1, %s9
  $region7: #{se_attention.1} parent=0 // loop_footer_branch
    %8 = sbr.rel target = $region3
  $region8: #{se_attention.1} parent=0 // loop_exit
    _

</llo_original>
